<compile_context>
chip_gen: v6e
topology: v6e:2x2x1
jax: 0.10.0
libtpu: 0.0.40
codegen_flags: <defaults>
</compile_context>

<pallas_src>
import functools
from typing import NamedTuple

import jax
import jax.numpy as jnp
from jax.experimental import pallas as pl
from jax.experimental.pallas import tpu as pltpu

_MiB = 1024 * 1024


# ----------------------------------------------------------------------------
# helpers
# ----------------------------------------------------------------------------
def _round_up(x, m):
    return ((x + m - 1) // m) * m


def _pick_i_chunk(intermediate_size, target):
    """Largest chunk of I that divides it, is a multiple of 128, and <= target."""
    if intermediate_size % 128 != 0:
        return intermediate_size            # full-I block (still a legal BlockSpec)
    c = min(intermediate_size, max(128, (target // 128) * 128))
    while intermediate_size % c != 0:
        c -= 128
    return c


def _tpu_vmem_capacity():
    """Per-core VMEM capacity in bytes; conservative 64 MiB (v7x) if unknown."""
    try:
        info = pltpu.get_tpu_info()
        for name in ("vmem_capacity_bytes", "vmem_size_bytes", "vmem_bytes"):
            v = getattr(info, name, None)
            if v:
                return int(v)
    except Exception:
        pass
    return 64 * _MiB


def _derive_row_block(M, H, ic_size, compute_bytes, out_bytes, vmem_cap, block_m=None):
    """Pick the row-block size and scoped-VMEM limit for this generation/workload."""
    if vmem_cap >= 100 * _MiB:               # v5e / v6e (128 MiB physical VMEM)
        vmem_limit = 100 * _MiB
        bm = 512 if block_m is None else block_m
    else:                                     # v7x (64 MiB per-TC VMEM)
        vmem_limit = min(max(vmem_cap - 8 * _MiB, 32 * _MiB), 56 * _MiB)
        bm = 384 if block_m is None else block_m

    bm = max(16, _round_up(min(bm, _round_up(M, 16)), 16))

    def vmem_need(b):
        return (b * H * 4                              # f32 accumulator scratch
                + 2 * b * H * compute_bytes            # x double buffer
                + 2 * b * H * out_bytes                # out double buffer
                + 2 * 3 * H * ic_size * compute_bytes)  # gateup + down weight chunks (x2 bufs)

    budget = vmem_limit - 4 * _MiB
    while vmem_need(bm) > budget and bm > 128:
        bm -= 128
    while vmem_need(bm) > budget and bm > 16:
        bm -= 16
    return bm, int(vmem_limit)


# ----------------------------------------------------------------------------
# One-time weight preparation (hoisted out of the forward path)
# ----------------------------------------------------------------------------
class PreparedMoEWeights(NamedTuple):
    w13_fused: jax.Array        # [E, num_ic, H, 2*ic]  (gate|up per I-chunk, H-major)
    w2t: jax.Array              # [E, I, H]
    ic_size: int
    num_ic: int
    intermediate_size: int
    hidden_size: int
    num_experts: int


def prepare_epmoe_weights(w13_weight, w2_weight, *, block_i=None, compute_dtype=None):
    """Equivalent of process_weights_after_loading: transpose + chunk-interleave once."""
    E, two_I, H = w13_weight.shape
    I = two_I // 2
    cdtype = compute_dtype if compute_dtype is not None else w13_weight.dtype
    if block_i is None:
        block_i = 512 if _tpu_vmem_capacity() >= 100 * _MiB else 256
    ic = _pick_i_chunk(I, block_i)
    num_ic = I // ic

    gate_t = jnp.swapaxes(w13_weight[:, :I, :], 1, 2).astype(cdtype)   # [E, H, I]
    up_t = jnp.swapaxes(w13_weight[:, I:, :], 1, 2).astype(cdtype)     # [E, H, I]
    g = gate_t.reshape(E, H, num_ic, ic).transpose(0, 2, 1, 3)          # [E, num_ic, H, ic]
    u = up_t.reshape(E, H, num_ic, ic).transpose(0, 2, 1, 3)
    w13_fused = jnp.concatenate([g, u], axis=-1)                        # [E, num_ic, H, 2ic]
    w2t = jnp.swapaxes(w2_weight, 1, 2).astype(cdtype)                  # [E, I, H]
    return PreparedMoEWeights(w13_fused, w2t, ic, num_ic, I, H, E)


# ----------------------------------------------------------------------------
# Pallas kernel: grouped GEMM (fused gate|up) -> silu_and_mul -> grouped GEMM (down)
# grid = (row_block b, I_chunk ic); expert picked per block via scalar prefetch.
# Padding blocks (b >= num_used) do nothing; their weight/x indices are pinned
# in the index_maps so Pallas skips the re-DMA.
# ----------------------------------------------------------------------------
def _epmoe_kernel(be_ref, br_ref, nu_ref, x_ref, w13_ref, w2_ref, o_ref, acc_ref,
                  *, ic_size):
    del be_ref, br_ref                       # consumed only by the index_maps
    b = pl.program_id(0)
    ic = pl.program_id(1)
    dn = (((1,), (0,)), ((), ()))            # contract along H / I-chunk, no in-kernel .T

    @pl.when(b < nu_ref[0])                  # skip all work on padding blocks
    def _compute():
        x = x_ref[...]                       # (BM, H), resident across the ic sweep
        gateup = jax.lax.dot_general(x, w13_ref[...], dn,
                                     preferred_element_type=jnp.float32)   # (BM, 2*ic)
        gate = gateup[:, :ic_size]
        up = gateup[:, ic_size:]
        act = gate * jax.nn.sigmoid(gate) * up                              # silu_and_mul
        partial = jax.lax.dot_general(act.astype(w2_ref.dtype), w2_ref[...], dn,
                                      preferred_element_type=jnp.float32)   # (BM, H)

        @pl.when(ic == 0)
        def _first():                        # write first partial directly (no zero-fill)
            acc_ref[...] = partial

        @pl.when(ic > 0)
        def _rest():
            acc_ref[...] += partial

        @pl.when(ic == pl.num_programs(1) - 1)
        def _finalize():
            o_ref[...] = acc_ref[...].astype(o_ref.dtype)


def _epmoe_grouped_mlp(block_expert, block_row, num_used, x_padded, w13_fused, w2t, *,
                       block_m, ic_size, num_ic, out_dtype, vmem_limit,
                       intermediate_size, num_experts, num_tokens_routed):
    M_pad, H = x_padded.shape
    num_blocks = M_pad // block_m
    I = intermediate_size

    kernel = functools.partial(_epmoe_kernel, ic_size=ic_size)

    def _ic_eff(b, ic, nu):
        # For padding blocks pin the I-chunk to the last one so the weight block
        # index is identical to the previous grid step -> no weight DMA.
        used = (b < nu[0]).astype(jnp.int32)
        return used * ic + (1 - used) * (num_ic - 1)

    def x_map(b, ic, be, br, nu):
        return (br[b], 0)                    # block_row pins padding blocks to the last used row block

    def w13_map(b, ic, be, br, nu):
        return (be[b], _ic_eff(b, ic, nu), 0, 0)

    def w2_map(b, ic, be, br, nu):
        return (be[b], _ic_eff(b, ic, nu), 0)

    def o_map(b, ic, be, br, nu):
        return (b, 0)

    cbytes = jnp.dtype(x_padded.dtype).itemsize
    wbytes = jnp.dtype(w13_fused.dtype).itemsize
    used_blocks_est = min(
        num_blocks,
        (num_tokens_routed + block_m - 1) // block_m + min(num_experts, num_tokens_routed))
    cost = pl.CostEstimate(
        flops=6 * num_tokens_routed * H * I,
        transcendentals=num_tokens_routed * I,
        bytes_accessed=(M_pad * H * (cbytes + jnp.dtype(out_dtype).itemsize)
                        + used_blocks_est * 3 * H * I * wbytes
                        + 8 * num_blocks),
    )

    return pl.pallas_call(
        kernel,
        out_shape=jax.ShapeDtypeStruct((M_pad, H), out_dtype),
        grid_spec=pltpu.PrefetchScalarGridSpec(
            num_scalar_prefetch=3,                 # block_expert, block_row, num_used -> SMEM
            grid=(num_blocks, num_ic),
            in_specs=[
                pl.BlockSpec((block_m, H), x_map),
                pl.BlockSpec((pl.Squeezed(), pl.Squeezed(), H, 2 * ic_size), w13_map),
                pl.BlockSpec((pl.Squeezed(), ic_size, H), w2_map),
            ],
            out_specs=pl.BlockSpec((block_m, H), o_map),
            scratch_shapes=[pltpu.VMEM((block_m, H), jnp.float32)],
        ),
        compiler_params=pltpu.CompilerParams(
            dimension_semantics=("parallel", "arbitrary"),
            vmem_limit_bytes=vmem_limit,
        ),
        cost_estimate=cost,
    )(block_expert, block_row, num_used, x_padded, w13_fused, w2t)


# ----------------------------------------------------------------------------
# EPMoE forward (tp_size=1, unquantized, silu, renormalize=True)
# ----------------------------------------------------------------------------
def epmoe_forward(hidden_states, router_logits, weights: PreparedMoEWeights, top_k, *,
                  block_m=None):
    T, H = hidden_states.shape
    assert H == weights.hidden_size
    E = weights.num_experts
    I = weights.intermediate_size
    ic = weights.ic_size
    num_ic = weights.num_ic
    cdtype = weights.w13_fused.dtype
    out_dtype = hidden_states.dtype
    M = T * top_k

    # ---- select_experts: softmax -> top_k -> renormalize (fused_topk semantics)
    scores = jax.nn.softmax(router_logits.astype(jnp.float32), axis=-1)
    topk_weights, topk_ids = jax.lax.top_k(scores, top_k)              # [T, top_k]
    topk_weights = topk_weights / jnp.sum(topk_weights, axis=-1, keepdims=True)
    flat_e = topk_ids.reshape(-1).astype(jnp.int32)                    # [M]
    flat_w = topk_weights.reshape(-1).astype(jnp.float32)              # [M]

    # ---- generation / workload dependent tile sizes
    cbytes = jnp.dtype(cdtype).itemsize
    obytes = jnp.dtype(out_dtype).itemsize
    bm, vmem_limit = _derive_row_block(M, H, ic, cbytes, obytes, _tpu_vmem_capacity(),
                                       block_m=block_m)

    # ---- run_moe_ep_preproess equivalent: sort assignments by expert, lay them out
    #      block-aligned so every row block maps to exactly one expert.
    num_blocks = (M + bm - 1) // bm + min(E, M)     # static upper bound on used blocks
    M_pad = num_blocks * bm

    group_sizes = jnp.bincount(flat_e, length=E)                        # [E]
    blocks_per_expert = (group_sizes + bm - 1) // bm                    # [E]
    block_cumsum = jnp.cumsum(blocks_per_expert).astype(jnp.int32)      # inclusive
    block_start = jnp.concatenate([jnp.zeros((1,), jnp.int32), block_cumsum[:-1]])
    row_cumsum = jnp.cumsum(group_sizes).astype(jnp.int32)
    seg_start = jnp.concatenate([jnp.zeros((1,), jnp.int32), row_cumsum[:-1]])  # seg_indptr

    num_used = block_cumsum[-1]                                         # dynamic scalar
    bids = jnp.arange(num_blocks, dtype=jnp.int32)
    be_raw = jnp.minimum(jnp.searchsorted(block_cumsum, bids, side="right"),
                         E - 1).astype(jnp.int32)
    last_used_expert = be_raw[jnp.maximum(num_used - 1, 0)]
    block_expert = jnp.where(bids < num_used, be_raw, last_used_expert).astype(jnp.int32)
    block_row = jnp.where(bids < num_used, bids,
                          jnp.maximum(num_used - 1, 0)).astype(jnp.int32)
    num_used_arr = jnp.reshape(num_used, (1,)).astype(jnp.int32)

    sort_idx = jnp.argsort(flat_e)                                      # [M]
    sorted_e = flat_e[sort_idx]
    sorted_tok = (sort_idx // top_k).astype(jnp.int32)
    rank_in_group = jnp.arange(M, dtype=jnp.int32) - seg_start[sorted_e]
    dest = block_start[sorted_e] * bm + rank_in_group                   # rows in padded slab

    # ---- pre_reorder: scatter dispatched tokens into the block-aligned slab
    x_padded = jnp.zeros((M_pad, H), cdtype).at[dest].set(
        hidden_states.astype(cdtype)[sorted_tok])

    # ---- hot path: grouped GEMM (fused gate|up) + silu_and_mul + grouped GEMM (down)
    down_padded = _epmoe_grouped_mlp(
        block_expert, block_row, num_used_arr, x_padded,
        weights.w13_fused, weights.w2t,
        block_m=bm, ic_size=ic, num_ic=num_ic, out_dtype=out_dtype,
        vmem_limit=vmem_limit, intermediate_size=I, num_experts=E,
        num_tokens_routed=M)                                            # [M_pad, H]

    # ---- post_reorder: routing weight applied in the gather, then per-token sum
    gathered = down_padded[dest].astype(jnp.float32) * flat_w[sort_idx][:, None]
    output = jnp.zeros((T, H), jnp.float32).at[sorted_tok].add(gathered)
    return output.astype(out_dtype)


# ----------------------------------------------------------------------------
# Pure-JAX reference (same math, no Pallas) for verification
# ----------------------------------------------------------------------------
def epmoe_reference(hidden_states, router_logits, w13_weight, w2_weight, top_k):
    T, H = hidden_states.shape
    I = w13_weight.shape[1] // 2
    scores = jax.nn.softmax(router_logits.astype(jnp.float32), axis=-1)
    topk_weights, topk_ids = jax.lax.top_k(scores, top_k)
    topk_weights = topk_weights / jnp.sum(topk_weights, axis=-1, keepdims=True)

    hp = jax.lax.Precision.HIGHEST
    out = jnp.zeros((T, H), dtype=jnp.float32)
    for k in range(top_k):
        e = topk_ids[:, k]
        w13_e = w13_weight[e]                                           # [T, 2I, H]
        w2_e = w2_weight[e]                                             # [T, H, I]
        gateup = jnp.einsum("th,toh->to", hidden_states.astype(jnp.float32),
                            w13_e.astype(jnp.float32), precision=hp)
        gate, up = gateup[:, :I], gateup[:, I:]
        act = gate * jax.nn.sigmoid(gate) * up
        down = jnp.einsum("ti,thi->th", act, w2_e.astype(jnp.float32), precision=hp)
        out = out + topk_weights[:, k:k + 1] * down
    return out.astype(hidden_states.dtype)


# ----------------------------------------------------------------------------
# self test
# ----------------------------------------------------------------------------
def _run_case(seed, T, E, top_k, H, I, compute_dtype, block_i, block_m, rtol, atol):
    key = jax.random.PRNGKey(seed)
    k1, k2, k3, k4 = jax.random.split(key, 4)
    hidden_states = jax.random.normal(k1, (T, H), dtype=jnp.float32)
    router_logits = jax.random.normal(k2, (T, E), dtype=jnp.float32)
    w13_weight = 0.05 * jax.random.normal(k3, (E, 2 * I, H), dtype=jnp.float32)
    w2_weight = 0.05 * jax.random.normal(k4, (E, H, I), dtype=jnp.float32)

    ref = jax.block_until_ready(
        epmoe_reference(hidden_states, router_logits, w13_weight, w2_weight, top_k))

    prepared = prepare_epmoe_weights(w13_weight, w2_weight,
                                     block_i=block_i, compute_dtype=compute_dtype)
    out = jax.block_until_ready(
        epmoe_forward(hidden_states, router_logits, prepared, top_k, block_m=block_m))
    assert out.shape == hidden_states.shape
    assert out.dtype == hidden_states.dtype
    assert jnp.allclose(out, ref, rtol=rtol, atol=atol), (
        f"mismatch (T={T}, E={E}, top_k={top_k}, H={H}, I={I}, "
        f"cdtype={compute_dtype}, max_err={jnp.max(jnp.abs(out - ref))})")


if __name__ == "__main__":
    # 1) small f32 path (tight check); default tile derivation
    _run_case(seed=0, T=8, E=4, top_k=2, H=128, I=128,
              compute_dtype=jnp.float32, block_i=None, block_m=None,
              rtol=2e-3, atol=2e-3)

    # 2) bf16 MXU-feeding path, multiple I-chunks (block_i=128 -> num_ic=2),
    #    small row blocks so several blocks per expert + padding blocks exercised
    _run_case(seed=1, T=64, E=8, top_k=2, H=128, I=256,
              compute_dtype=jnp.bfloat16, block_i=128, block_m=16,
              rtol=8e-2, atol=8e-2)

    # 3) decode-like: many experts, few tokens -> most experts empty, heavy
    #    padding-block path (pinned index maps + pl.when guard)
    _run_case(seed=2, T=4, E=16, top_k=2, H=128, I=128,
              compute_dtype=jnp.float32, block_i=None, block_m=None,
              rtol=2e-3, atol=2e-3)

    print("KERNEL_OK")
</pallas_src>

<mosaic_0001>
module attributes {stable_mosaic.version = 11 : i64} {
  func.func @_epmoe_kernel(%arg0: i32, %arg1: i32, %arg2: memref<5xi32, #tpu.memory_space<smem>>, %arg3: memref<5xi32, #tpu.memory_space<smem>>, %arg4: memref<1xi32, #tpu.memory_space<smem>>, %arg5: memref<16x128xf32, #tpu.memory_space<vmem>>, %arg6: memref<1x1x128x256xf32, #tpu.memory_space<vmem>>, %arg7: memref<1x128x128xf32, #tpu.memory_space<vmem>>, %arg8: memref<16x128xf32, #tpu.memory_space<vmem>>, %arg9: memref<16x128xf32, #tpu.memory_space<vmem>>) attributes {dimension_semantics = [#tpu.dimension_semantics<parallel>, #tpu.dimension_semantics<arbitrary>], iteration_bounds = array<i64: 5, 1>, scalar_prefetch = 3 : i64, scratch_operands = 1 : i64, tpu.core_type = #tpu.core_type<tc>, window_params = [{transform_indices = @transform_0, window_bounds = array<i64: 16, 128>}, {transform_indices = @transform_1, window_bounds = array<i64: 1, 1, 128, 256>}, {transform_indices = @transform_2, window_bounds = array<i64: 1, 128, 128>}, {transform_indices = @transform_3, window_bounds = array<i64: 16, 128>}]} {
    %c0 = arith.constant 0 : index
    %0 = memref.load %arg4[%c0] : memref<1xi32, #tpu.memory_space<smem>>
    %1 = arith.cmpi slt, %arg0, %0 : i32
    %2 = arith.extui %1 : i1 to i32
    %c0_i32 = arith.constant 0 : i32
    %3 = arith.cmpi ne, %2, %c0_i32 : i32
    scf.if %3 {
      %c0_0 = arith.constant 0 : index
      %c0_1 = arith.constant 0 : index
      %4 = vector.load %arg5[%c0_0, %c0_1] : memref<16x128xf32, #tpu.memory_space<vmem>>, vector<16x128xf32>
      %c0_2 = arith.constant 0 : index
      %c0_3 = arith.constant 0 : index
      %c0_4 = arith.constant 0 : index
      %c0_5 = arith.constant 0 : index
      %5 = vector.load %arg6[%c0_2, %c0_3, %c0_4, %c0_5] : memref<1x1x128x256xf32, #tpu.memory_space<vmem>>, vector<1x1x128x256xf32>
      %6 = vector.shape_cast %5 : vector<1x1x128x256xf32> to vector<128x256xf32>
      %cst = arith.constant dense<0.000000e+00> : vector<16x256xf32>
      %7 = tpu.matmul %4, %6, %cst {dimension_numbers = #tpu.dot_dimension_numbers<[1], [0], [0], [1], [0, 0, 1, 1], [], []>} : vector<16x128xf32>, vector<128x256xf32>, vector<16x256xf32> -> vector<16x256xf32>
      %8 = vector.extract_strided_slice %7 {offsets = [0, 0], sizes = [16, 128], strides = [1, 1]} : vector<16x256xf32> to vector<16x128xf32>
      %9 = vector.extract_strided_slice %7 {offsets = [0, 128], sizes = [16, 128], strides = [1, 1]} : vector<16x256xf32> to vector<16x128xf32>
      %10 = arith.negf %8 : vector<16x128xf32>
      %11 = math.exp %10 : vector<16x128xf32>
      %cst_6 = arith.constant 1.000000e+00 : f32
      %12 = vector.broadcast %cst_6 : f32 to vector<16x128xf32>
      %13 = arith.addf %12, %11 : vector<16x128xf32>
      %14 = arith.divf %12, %13 : vector<16x128xf32>
      %15 = arith.mulf %8, %14 : vector<16x128xf32>
      %16 = arith.mulf %15, %9 : vector<16x128xf32>
      %c0_7 = arith.constant 0 : index
      %c0_8 = arith.constant 0 : index
      %c0_9 = arith.constant 0 : index
      %17 = vector.load %arg7[%c0_7, %c0_8, %c0_9] : memref<1x128x128xf32, #tpu.memory_space<vmem>>, vector<1x128x128xf32>
      %18 = vector.shape_cast %17 : vector<1x128x128xf32> to vector<128x128xf32>
      %cst_10 = arith.constant dense<0.000000e+00> : vector<16x128xf32>
      %19 = tpu.matmul %16, %18, %cst_10 {dimension_numbers = #tpu.dot_dimension_numbers<[1], [0], [0], [1], [0, 0, 1, 1], [], []>} : vector<16x128xf32>, vector<128x128xf32>, vector<16x128xf32> -> vector<16x128xf32>
      %c0_i32_11 = arith.constant 0 : i32
      %20 = arith.cmpi eq, %arg1, %c0_i32_11 : i32
      %21 = arith.extui %20 : i1 to i32
      %c0_i32_12 = arith.constant 0 : i32
      %22 = arith.cmpi ne, %21, %c0_i32_12 : i32
      scf.if %22 {
        %c0_17 = arith.constant 0 : index
        %c0_18 = arith.constant 0 : index
        %29 = vector.load %arg9[%c0_17, %c0_18] : memref<16x128xf32, #tpu.memory_space<vmem>>, vector<16x128xf32>
        tpu.vector_store %arg9[%c0_17, %c0_18], %19 {strides = array<i32>} : memref<16x128xf32, #tpu.memory_space<vmem>>, vector<16x128xf32>,
      } else {
      }
      %c0_i32_13 = arith.constant 0 : i32
      %23 = arith.cmpi sgt, %arg1, %c0_i32_13 : i32
      %24 = arith.extui %23 : i1 to i32
      %c0_i32_14 = arith.constant 0 : i32
      %25 = arith.cmpi ne, %24, %c0_i32_14 : i32
      scf.if %25 {
        %c0_17 = arith.constant 0 : index
        %c0_18 = arith.constant 0 : index
        %29 = vector.load %arg9[%c0_17, %c0_18] : memref<16x128xf32, #tpu.memory_space<vmem>>, vector<16x128xf32>
        %30 = arith.addf %29, %19 : vector<16x128xf32>
        %c0_19 = arith.constant 0 : index
        %c0_20 = arith.constant 0 : index
        %31 = vector.load %arg9[%c0_19, %c0_20] : memref<16x128xf32, #tpu.memory_space<vmem>>, vector<16x128xf32>
        tpu.vector_store %arg9[%c0_19, %c0_20], %30 {strides = array<i32>} : memref<16x128xf32, #tpu.memory_space<vmem>>, vector<16x128xf32>,
      } else {
      }
      %c0_i32_15 = arith.constant 0 : i32
      %26 = arith.cmpi eq, %arg1, %c0_i32_15 : i32
      %27 = arith.extui %26 : i1 to i32
      %c0_i32_16 = arith.constant 0 : i32
      %28 = arith.cmpi ne, %27, %c0_i32_16 : i32
      scf.if %28 {
        %c0_17 = arith.constant 0 : index
        %c0_18 = arith.constant 0 : index
        %29 = vector.load %arg9[%c0_17, %c0_18] : memref<16x128xf32, #tpu.memory_space<vmem>>, vector<16x128xf32>
        %c0_19 = arith.constant 0 : index
        %c0_20 = arith.constant 0 : index
        %30 = vector.load %arg8[%c0_19, %c0_20] : memref<16x128xf32, #tpu.memory_space<vmem>>, vector<16x128xf32>
        tpu.vector_store %arg8[%c0_19, %c0_20], %29 {strides = array<i32>} : memref<16x128xf32, #tpu.memory_space<vmem>>, vector<16x128xf32>,
      } else {
      }
    } else {
    }
    return
  }
  func.func @transform_0(%arg0: i32, %arg1: i32, %arg2: memref<5xi32, #tpu.memory_space<smem>>, %arg3: memref<5xi32, #tpu.memory_space<smem>>, %arg4: memref<1xi32, #tpu.memory_space<smem>>) -> (i32, i32) {
    %0 = arith.index_cast %arg0 : i32 to index
    %1 = memref.load %arg3[%0] : memref<5xi32, #tpu.memory_space<smem>>
    %c0_i32 = arith.constant 0 : i32
    %c0_i32_0 = arith.constant 0 : i32
    return %1, %c0_i32 : i32, i32
  }
  func.func @transform_1(%arg0: i32, %arg1: i32, %arg2: memref<5xi32, #tpu.memory_space<smem>>, %arg3: memref<5xi32, #tpu.memory_space<smem>>, %arg4: memref<1xi32, #tpu.memory_space<smem>>) -> (i32, i32, i32, i32) {
    %0 = arith.index_cast %arg0 : i32 to index
    %1 = memref.load %arg2[%0] : memref<5xi32, #tpu.memory_space<smem>>
    %c0 = arith.constant 0 : index
    %2 = memref.load %arg4[%c0] : memref<1xi32, #tpu.memory_space<smem>>
    %3 = arith.cmpi slt, %arg0, %2 : i32
    %4 = arith.extui %3 : i1 to i32
    %5 = arith.muli %4, %arg1 : i32
    %c1_i32 = arith.constant 1 : i32
    %6 = arith.subi %c1_i32, %4 : i32
    %c0_i32 = arith.constant 0 : i32
    %7 = arith.muli %6, %c0_i32 : i32
    %8 = arith.addi %5, %7 : i32
    %c0_i32_0 = arith.constant 0 : i32
    %c0_i32_1 = arith.constant 0 : i32
    %c0_i32_2 = arith.constant 0 : i32
    return %1, %8, %c0_i32_0, %c0_i32_1 : i32, i32, i32, i32
  }
  func.func @transform_2(%arg0: i32, %arg1: i32, %arg2: memref<5xi32, #tpu.memory_space<smem>>, %arg3: memref<5xi32, #tpu.memory_space<smem>>, %arg4: memref<1xi32, #tpu.memory_space<smem>>) -> (i32, i32, i32) {
    %0 = arith.index_cast %arg0 : i32 to index
    %1 = memref.load %arg2[%0] : memref<5xi32, #tpu.memory_space<smem>>
    %c0 = arith.constant 0 : index
    %2 = memref.load %arg4[%c0] : memref<1xi32, #tpu.memory_space<smem>>
    %3 = arith.cmpi slt, %arg0, %2 : i32
    %4 = arith.extui %3 : i1 to i32
    %5 = arith.muli %4, %arg1 : i32
    %c1_i32 = arith.constant 1 : i32
    %6 = arith.subi %c1_i32, %4 : i32
    %c0_i32 = arith.constant 0 : i32
    %7 = arith.muli %6, %c0_i32 : i32
    %8 = arith.addi %5, %7 : i32
    %c0_i32_0 = arith.constant 0 : i32
    %c0_i32_1 = arith.constant 0 : i32
    return %1, %8, %c0_i32_0 : i32, i32, i32
  }
  func.func @transform_3(%arg0: i32, %arg1: i32, %arg2: memref<5xi32, #tpu.memory_space<smem>>, %arg3: memref<5xi32, #tpu.memory_space<smem>>, %arg4: memref<1xi32, #tpu.memory_space<smem>>) -> (i32, i32) {
    %c0_i32 = arith.constant 0 : i32
    %c0_i32_0 = arith.constant 0 : i32
    return %arg0, %c0_i32 : i32, i32
  }
}

</mosaic_0001>

<llo_original>
// kernel: tpu_custom_call.1
$region0: #{tpu_custom_call.1}
  #allocation0 [shape = 'u32[]', space=smem, size = 0x4, offset = 0x4, fixed_abs, tag = 'smem constant byte address 0x4 - core index']
  #allocation1 [shape = 'u32[144,128]{1,0:T(1,128)}', space=vmem, size = 0x12000, scoped, tag = 'internal scratch']
  #allocation2 [shape = 'f32[16,128]{1,0:T(8,128)}', space=vmem, size = 0x2000, scoped, tag = 'scratch operand']
  #allocation3 [shape = 's32[1]{0}', space=sflag, size = 0x4, scoped, tag = 'scoped memory for tpu_custom_call.1']
  #allocation4 [shape = 'u8[512]{0}', space=smem, size = 0x200, scoped, tag = 'prefetched SMEM operand 0']
  #allocation5 [shape = 'u8[512]{0}', space=smem, size = 0x200, scoped, tag = 'prefetched SMEM operand 1']
  #allocation6 [shape = 's32[1]{0:T(128)S(6)}', space=smem, size = 0x200, scoped, tag = 'prefetched SMEM operand 2']
  %s0 = inlined_call_operand.vmem [shape: s32[5], index: 0, kind: input, shape index: {}]
  %s1 = inlined_call_operand.vmem [shape: s32[5], index: 1, kind: input, shape index: {}]
  %s2 = inlined_call_operand.<no memory space> [shape: s32[1], index: 2, kind: input, shape index: {}]
  %s3 = inlined_call_operand.hbm [shape: f32[80,128], index: 3, kind: input, shape index: {}]
  %s4 = inlined_call_operand.hbm [shape: f32[4,1,128,256], index: 4, kind: input, shape index: {}]
  %s5 = inlined_call_operand.hbm [shape: f32[4,128,128], index: 5, kind: input, shape index: {}]
  %s6 = inlined_call_operand.hbm [shape: f32[80,128], index: 6, kind: output, shape index: {}]
  %s7 = sld [smem:[#allocation0]]
  $region73: #{tpu_custom_call.1} parent=0
    _
  %s9 = ssub.s32 1, %s7
  %s10 = scalar_select 0, %s9, %s7
  %s11 = sshll.u32 %s0, 4
  %s12 = int_to_ptr.vmem [resolvable:$true] %s11
  %14 = dma.vmem_to_smem %s12, 16, [#allocation4], [#allocation3]
  %s15 = sshll.u32 %s1, 4
  %s16 = int_to_ptr.vmem [resolvable:$true] %s15
  %18 = dma.vmem_to_smem %s16, 16, [#allocation5], [#allocation3]
  %19 = sst [smem:[#allocation6]] %s2
  %20 = dma.done [#allocation3], 32
  %21 = sfence
  $region1: #{tpu_custom_call.1} parent=0
    #allocation7 [shape = 'u8[16384]{0}', space=vmem, size = 0x4000, scoped, tag = 'input window, operand 3']
    #allocation8 [shape = 's32[2]{0}', space=sflag, size = 0x8, scoped, tag = 'scoped memory for tpu_custom_call.1']
    #allocation9 [shape = 's32[2]{0}', space=sflag, size = 0x8, scoped, tag = 'scoped memory for tpu_custom_call.1']
    #allocation10 [shape = 'u8[262144]{0}', space=vmem, size = 0x40000, scoped, tag = 'input window, operand 4']
    #allocation11 [shape = 's32[2]{0}', space=sflag, size = 0x8, scoped, tag = 'scoped memory for tpu_custom_call.1']
    #allocation12 [shape = 'u8[131072]{0}', space=vmem, size = 0x20000, scoped, tag = 'input window, operand 5']
    #allocation13 [shape = 'u8[16384]{0}', space=vmem, size = 0x4000, scoped, tag = 'output window, operand 0']
    %22 = vsyncpa [#allocation8], 0
    %s23 = scalar_lea.sflag [#allocation8], 1
    %24 = vsyncpa %s23, 0
    %25 = vsyncpa [#allocation11], 0
    %s26 = scalar_lea.sflag [#allocation11], 1
    %27 = vsyncpa %s26, 0
    %28 = vsyncpa [#allocation9], 0
    %s29 = scalar_lea.sflag [#allocation9], 1
    %30 = vsyncpa %s29, 0
    loop: start=0, step=1, limit=7
    $region2: #{tpu_custom_call.1} parent=1 // loop_pre_header
      _
    $region3: #{tpu_custom_call.1} parent=1 // loop_header
      %s32 = sphi 0, %s36
      %p33 = scmp.ge.s32.totalorder %s32, 7
      %s39 = sphi 0, %s51
      %s40 = sphi 0, %s47
      %s41 = sphi 0, %s39
      %s42 = sphi 0, %s40
      %s43 = sphi 0, %s41
      %s44 = sphi 0, %s42
      %s56 = sphi 0, %s58
      %s59 = sphi 0, %s56
      %s60 = sphi 0, %s59
      %s76 = sphi 0, %s60
      %s94 = sphi 0, %s96
      %s97 = sphi 0, %s94
      %s98 = sphi 0, %s97
      %s114 = sphi 0, %s98
      %s132 = sphi 0, %s134
      %s135 = sphi 0, %s132
      %s136 = sphi 0, %s135
      %s152 = sphi 0, %s136
      %s158 = sphi 0, %s160
      %s161 = sphi 0, %s158
      %s162 = sphi 0, %s161
      %s178 = sphi 0, %s162
    $region4: #{tpu_custom_call.1} parent=1 // loop_header_branch
      %35 = sbr.rel (%p33) target = $region8
    $region5: #{tpu_custom_call.1} parent=1 // loop_body
      %s37 = ssub.s32 %s32, 1
      %s38 = ssub.s32 %s32, 2
      %s45 = sadd.s32 1, %s40
      %p46 = scmp.ge.s32.totalorder %s45, 1
      %s47 = scalar_select %p46, 0, %s45
      %s48 = sadd.s32 1, %s39
      %s49 = scalar_select %p46, %s48, %s39
      %p50 = scmp.ge.s32.totalorder %s49, 5
      %s51 = scalar_select %p50, 0, %s49
      %s52 = sld [smem:[#allocation5 + %s39]]
      %s53 = sld [smem:[#allocation5 + %s51]]
      %s54 = ssub.s32 %s52, %s53
      %p55 = scmp.eq.s32.totalorder %s54, 0
      %s57 = sadd.s32 %s56, 1
      %s58 = scalar_select %p55, %s56, %s57
      %p61 = pneg %p55
      %p62 = scmp.eq.s32.totalorder %s32, 4
      %p63 = por %p61, %p62
      %p64 = scmp.ne.s32.totalorder %s56, %s59
      %p65 = scmp.eq.s32.totalorder %s32, 0
      %p66 = por %p64, %p65
      %p67 = scmp.ne.s32.totalorder %s56, %s59
      %p68 = scmp.eq.s32.totalorder %s37, 4
      %p69 = por %p67, %p68
      %p70 = scmp.ne.s32.totalorder %s59, %s60
      %p71 = scmp.eq.s32.totalorder %s37, 0
      %p72 = por %p70, %p71
      %p73 = scmp.ne.s32.totalorder %s59, %s60
      %p74 = scmp.eq.s32.totalorder %s38, 4
      %p75 = por %p73, %p74
      %p77 = scmp.ne.s32.totalorder %s60, %s76
      %p78 = scmp.eq.s32.totalorder %s38, 0
      %p79 = por %p77, %p78
      %s80 = sld [smem:[#allocation4 + %s39]]
      %s81 = sld [smem:[#allocation6]]
      %p82 = scmp.lt.s32.totalorder %s39, %s81
      %s83 = scalar_select %p82, 1, 0
      %s84 = smul.u32 %s83, %s40
      %s85 = sld [smem:[#allocation4 + %s51]]
      %s86 = sld [smem:[#allocation6]]
      %p87 = scmp.lt.s32.totalorder %s51, %s86
      %s88 = scalar_select %p87, 1, 0
      %s89 = smul.u32 %s88, %s47
      %s90 = ssub.s32 %s80, %s85
      %s91 = ssub.s32 %s84, %s89
      %s92 = sor.u32 %s90, %s91
      %p93 = scmp.eq.s32.totalorder %s92, 0
      %s95 = sadd.s32 %s94, 1
      %s96 = scalar_select %p93, %s94, %s95
      %p99 = pneg %p93
      %p100 = scmp.eq.s32.totalorder %s32, 4
      %p101 = por %p99, %p100
      %p102 = scmp.ne.s32.totalorder %s94, %s97
      %p103 = scmp.eq.s32.totalorder %s32, 0
      %p104 = por %p102, %p103
      %p105 = scmp.ne.s32.totalorder %s94, %s97
      %p106 = scmp.eq.s32.totalorder %s37, 4
      %p107 = por %p105, %p106
      %p108 = scmp.ne.s32.totalorder %s97, %s98
      %p109 = scmp.eq.s32.totalorder %s37, 0
      %p110 = por %p108, %p109
      %p111 = scmp.ne.s32.totalorder %s97, %s98
      %p112 = scmp.eq.s32.totalorder %s38, 4
      %p113 = por %p111, %p112
      %p115 = scmp.ne.s32.totalorder %s98, %s114
      %p116 = scmp.eq.s32.totalorder %s38, 0
      %p117 = por %p115, %p116
      %s118 = sld [smem:[#allocation4 + %s39]]
      %s119 = sld [smem:[#allocation6]]
      %p120 = scmp.lt.s32.totalorder %s39, %s119
      %s121 = scalar_select %p120, 1, 0
      %s122 = smul.u32 %s121, %s40
      %s123 = sld [smem:[#allocation4 + %s51]]
      %s124 = sld [smem:[#allocation6]]
      %p125 = scmp.lt.s32.totalorder %s51, %s124
      %s126 = scalar_select %p125, 1, 0
      %s127 = smul.u32 %s126, %s47
      %s128 = ssub.s32 %s118, %s123
      %s129 = ssub.s32 %s122, %s127
      %s130 = sor.u32 %s128, %s129
      %p131 = scmp.eq.s32.totalorder %s130, 0
      %s133 = sadd.s32 %s132, 1
      %s134 = scalar_select %p131, %s132, %s133
      %p137 = pneg %p131
      %p138 = scmp.eq.s32.totalorder %s32, 4
      %p139 = por %p137, %p138
      %p140 = scmp.ne.s32.totalorder %s132, %s135
      %p141 = scmp.eq.s32.totalorder %s32, 0
      %p142 = por %p140, %p141
      %p143 = scmp.ne.s32.totalorder %s132, %s135
      %p144 = scmp.eq.s32.totalorder %s37, 4
      %p145 = por %p143, %p144
      %p146 = scmp.ne.s32.totalorder %s135, %s136
      %p147 = scmp.eq.s32.totalorder %s37, 0
      %p148 = por %p146, %p147
      %p149 = scmp.ne.s32.totalorder %s135, %s136
      %p150 = scmp.eq.s32.totalorder %s38, 4
      %p151 = por %p149, %p150
      %p153 = scmp.ne.s32.totalorder %s136, %s152
      %p154 = scmp.eq.s32.totalorder %s38, 0
      %p155 = por %p153, %p154
      %s156 = ssub.s32 %s39, %s51
      %p157 = scmp.eq.s32.totalorder %s156, 0
      %s159 = sadd.s32 %s158, 1
      %s160 = scalar_select %p157, %s158, %s159
      %p163 = pneg %p157
      %p164 = scmp.eq.s32.totalorder %s32, 4
      %p165 = por %p163, %p164
      %p166 = scmp.ne.s32.totalorder %s158, %s161
      %p167 = scmp.eq.s32.totalorder %s32, 0
      %p168 = por %p166, %p167
      %p169 = scmp.ne.s32.totalorder %s158, %s161
      %p170 = scmp.eq.s32.totalorder %s37, 4
      %p171 = por %p169, %p170
      %p172 = scmp.ne.s32.totalorder %s161, %s162
      %p173 = scmp.eq.s32.totalorder %s37, 0
      %p174 = por %p172, %p173
      %p175 = scmp.ne.s32.totalorder %s161, %s162
      %p176 = scmp.eq.s32.totalorder %s38, 4
      %p177 = por %p175, %p176
      %p179 = scmp.ne.s32.totalorder %s162, %s178
      %p180 = scmp.eq.s32.totalorder %s38, 0
      %p181 = por %p179, %p180
      %p182 = scmp.le.s32.totalorder 1, %s32
      %p183 = scmp.lt.s32.totalorder %s32, 6
      %p184 = pnand %p182, %p183
      %p185 = pneg %p184
      // Predicated region
      $region9: #{tpu_custom_call.1} parent=5 // pred_check
        _
      $region10: #{tpu_custom_call.1} parent=5 // pred_check_branch
        %187 = sbr.rel (%p184) target = $region12
      $region11: #{tpu_custom_call.1} parent=5 // pred_region
        %s188 = ssub.s32 %s32, 1
      $region12: #{tpu_custom_call.1} parent=5 // pred_fallthru
        _
      %p189 = scmp.lt.s32.totalorder %s32, 5
      // Predicated region
      $region13: #{tpu_custom_call.1} parent=5 // pred_check
        %p190 = pneg %p189
      $region14: #{tpu_custom_call.1} parent=5 // pred_check_branch
        %192 = sbr.rel (%p190) target = $region16
      $region15: #{tpu_custom_call.1} parent=5 // pred_region
        // Predicated region
        $region17: #{tpu_custom_call.1} parent=15 // pred_check
          %p193 = pneg %p66
        $region18: #{tpu_custom_call.1} parent=15 // pred_check_branch
          %195 = sbr.rel (%p193) target = $region20
        $region19: #{tpu_custom_call.1} parent=15 // pred_region
          %s196 = sand.u32 %s56, 1
          %s197 = scalar_lea.sflag [#allocation8], %s196
          %s198 = sand.u32 %s56, 1
          %s199 = smul.addr %s198, 16
          %s200 = scalar_lea.vmem [#allocation7], %s199
          %s201 = sld [smem:[#allocation5 + %s39]]
          %s202 = smul.u32 2, %s201
          %s204 = ssub.s32 256, 256
          %205 = vsyncadd %s197, %s204
          %s206 = smul.addr %s202, 128
          %s207 = scalar_lea.hbm %s3, %s206
          %s208 = sshll.u32 %s200, 4
          %s209 = int_to_ptr.vmem [resolvable:$true] %s208
          %214 = dma.hbm_to_vmem [thread:$0]  %s207, 256, %s209, %s197, 128, 128, 8
        $region20: #{tpu_custom_call.1} parent=15 // pred_fallthru
          _
        // Predicated region
        $region21: #{tpu_custom_call.1} parent=15 // pred_check
          %p215 = pneg %p104
        $region22: #{tpu_custom_call.1} parent=15 // pred_check_branch
          %217 = sbr.rel (%p215) target = $region24
        $region23: #{tpu_custom_call.1} parent=15 // pred_region
          %s218 = sand.u32 %s32, 1
          %s219 = scalar_lea.sflag [#allocation11], %s218
          %s220 = sand.u32 %s94, 1
          %s221 = smul.addr %s220, 256
          %s222 = scalar_lea.vmem [#allocation10], %s221
          %s223 = sld [smem:[#allocation4 + %s39]]
          %s224 = sld [smem:[#allocation6]]
          %p225 = scmp.lt.s32.totalorder %s39, %s224
          %s226 = scalar_select %p225, 1, 0
          %s227 = smul.u32 %s226, %s40
          %s229 = ssub.s32 4096, 4096
          %230 = vsyncadd %s219, %s229
          %s231 = smul.addr %s227, 32
          %s232 = smul.addr %s223, 32
          %s233 = sadd.s32 %s231, %s232
          %s234 = smul.addr %s233, 128
          %s235 = scalar_lea.hbm %s4, %s234
          %s236 = sshll.u32 %s222, 4
          %s237 = int_to_ptr.vmem [resolvable:$true] %s236
          %242 = dma.hbm_to_vmem [thread:$0]  %s235, 4096, %s237, %s219, 256, 256, 16
        $region24: #{tpu_custom_call.1} parent=15 // pred_fallthru
          _
        // Predicated region
        $region25: #{tpu_custom_call.1} parent=15 // pred_check
          %p243 = pneg %p142
        $region26: #{tpu_custom_call.1} parent=15 // pred_check_branch
          %245 = sbr.rel (%p243) target = $region28
        $region27: #{tpu_custom_call.1} parent=15 // pred_region
          %s246 = sand.u32 %s32, 1
          %s247 = scalar_lea.sflag [#allocation11], %s246
          %s248 = sand.u32 %s132, 1
          %s249 = smul.addr %s248, 128
          %s250 = scalar_lea.vmem [#allocation12], %s249
          %s251 = sld [smem:[#allocation4 + %s39]]
          %s252 = sld [smem:[#allocation6]]
          %p253 = scmp.lt.s32.totalorder %s39, %s252
          %s254 = scalar_select %p253, 1, 0
          %s255 = smul.u32 %s254, %s40
          %s256 = smul.u32 16, %s255
          %s258 = ssub.s32 2048, 2048
          %259 = vsyncadd %s247, %s258
          %s260 = smul.addr %s251, 16
          %s261 = sadd.s32 %s256, %s260
          %s262 = smul.addr %s261, 128
          %s263 = scalar_lea.hbm %s5, %s262
          %s264 = sshll.u32 %s250, 4
          %s265 = int_to_ptr.vmem [resolvable:$true] %s264
          %270 = dma.hbm_to_vmem [thread:$0]  %s263, 2048, %s265, %s247, 128, 128, 8
        $region28: #{tpu_custom_call.1} parent=15 // pred_fallthru
          _
      $region16: #{tpu_custom_call.1} parent=5 // pred_fallthru
        _
      %p271 = scmp.le.s32.totalorder 1, %s32
      %p272 = scmp.lt.s32.totalorder %s32, 6
      %p273 = pnand %p271, %p272
      %p274 = pneg %p273
      // Predicated region
      $region29: #{tpu_custom_call.1} parent=5 // pred_check
        _
      $region30: #{tpu_custom_call.1} parent=5 // pred_check_branch
        %276 = sbr.rel (%p273) target = $region32
      $region31: #{tpu_custom_call.1} parent=5 // pred_region
        %s277 = ssub.s32 %s32, 1
        %s278 = sand.u32 %s59, 1
        %s279 = scalar_lea.sflag [#allocation8], %s278
        %s280 = sand.u32 %s59, 1
        %s281 = smul.addr %s280, 16
        %s282 = scalar_lea.vmem [#allocation7], %s281
        // Predicated region
        $region33: #{tpu_custom_call.1} parent=31 // pred_check
          %p283 = pneg %p72
        $region34: #{tpu_custom_call.1} parent=31 // pred_check_branch
          %285 = sbr.rel (%p283) target = $region36
        $region35: #{tpu_custom_call.1} parent=31 // pred_region
          %286 = dma.done %s279, 256
        $region36: #{tpu_custom_call.1} parent=31 // pred_fallthru
          _
        %s287 = sand.u32 %s37, 1
        %s288 = scalar_lea.sflag [#allocation11], %s287
        %s289 = sand.u32 %s97, 1
        %s290 = smul.addr %s289, 256
        %s291 = scalar_lea.vmem [#allocation10], %s290
        // Predicated region
        $region37: #{tpu_custom_call.1} parent=31 // pred_check
          %p292 = pneg %p110
        $region38: #{tpu_custom_call.1} parent=31 // pred_check_branch
          %294 = sbr.rel (%p292) target = $region40
        $region39: #{tpu_custom_call.1} parent=31 // pred_region
          %295 = dma.done %s288, 4096
        $region40: #{tpu_custom_call.1} parent=31 // pred_fallthru
          _
        %s296 = sand.u32 %s37, 1
        %s297 = scalar_lea.sflag [#allocation11], %s296
        %s298 = sand.u32 %s135, 1
        %s299 = smul.addr %s298, 128
        %s300 = scalar_lea.vmem [#allocation12], %s299
        // Predicated region
        $region41: #{tpu_custom_call.1} parent=31 // pred_check
          %p301 = pneg %p148
        $region42: #{tpu_custom_call.1} parent=31 // pred_check_branch
          %303 = sbr.rel (%p301) target = $region44
        $region43: #{tpu_custom_call.1} parent=31 // pred_region
          %304 = dma.done %s297, 2048
        $region44: #{tpu_custom_call.1} parent=31 // pred_fallthru
          _
        %s305 = sand.u32 %s59, 1
        %s306 = scalar_lea.sflag [#allocation8], %s305
        %s307 = sand.u32 %s59, 1
        %s308 = smul.addr %s307, 16
        %s309 = scalar_lea.vmem [#allocation7], %s308
        %p310 = pneg %p72
        %p311 = pneg %p69
        %s312 = sand.u32 %s37, 1
        %s313 = scalar_lea.sflag [#allocation11], %s312
        %s314 = sand.u32 %s97, 1
        %s315 = smul.addr %s314, 256
        %s316 = scalar_lea.vmem [#allocation10], %s315
        %p317 = pneg %p110
        %p318 = pneg %p107
        %s319 = sand.u32 %s37, 1
        %s320 = scalar_lea.sflag [#allocation11], %s319
        %s321 = sand.u32 %s135, 1
        %s322 = smul.addr %s321, 128
        %s323 = scalar_lea.vmem [#allocation12], %s322
        %p324 = pneg %p148
        %p325 = pneg %p145
        %p326 = pneg %p174
        %p327 = pneg %p171
        %s328 = sand.u32 %s161, 1
        %s329 = scalar_lea.sflag [#allocation9], %s328
        %s330 = sand.u32 %s161, 1
        %s331 = smul.addr %s330, 16
        %s332 = scalar_lea.vmem [#allocation13], %s331
        %s333 = sld [smem:[#allocation5 + %s41]]
        %s334 = smul.u32 2, %s333
        %s335 = sld [smem:[#allocation4 + %s41]]
        %s336 = sld [smem:[#allocation6]]
        %p337 = scmp.lt.s32.totalorder %s41, %s336
        %s338 = scalar_select %p337, 1, 0
        %s339 = smul.u32 %s338, %s42
        %s340 = sld [smem:[#allocation4 + %s41]]
        %s341 = sld [smem:[#allocation6]]
        %p342 = scmp.lt.s32.totalorder %s41, %s341
        %s343 = scalar_select %p342, 1, 0
        %s344 = smul.u32 %s343, %s42
        %s345 = smul.u32 16, %s344
        %s346 = smul.u32 2, %s41
        %s347 = sld [smem:[#allocation6]]
        %p348 = scmp.lt.s32.totalorder %s41, %s347
        // Predicated region
        $region45: #{tpu_custom_call.1} parent=31 // pred_check
          %p349 = pneg %p348
        $region46: #{tpu_custom_call.1} parent=31 // pred_check_branch
          %351 = sbr.rel (%p349) target = $region48
        $region47: #{tpu_custom_call.1} parent=31 // pred_region
          %v352 = vld [vmem:[%s282] sm:$0xff]
          %v353 = vld [vmem:[%s282 + $0x8] sm:$0xff]
          %v354 = vld [vmem:[%s291] sm:$0xff]
          %v355 = vld [vmem:[%s291 + $0x8] sm:$0xff]
          %v356 = vld [vmem:[%s291 + $0x10] sm:$0xff]
          %v357 = vld [vmem:[%s291 + $0x18] sm:$0xff]
          %v358 = vld [vmem:[%s291 + $0x20] sm:$0xff]
          %v359 = vld [vmem:[%s291 + $0x28] sm:$0xff]
          %v360 = vld [vmem:[%s291 + $0x30] sm:$0xff]
          %v361 = vld [vmem:[%s291 + $0x38] sm:$0xff]
          %v362 = vld [vmem:[%s291 + $0x40] sm:$0xff]
          %v363 = vld [vmem:[%s291 + $0x48] sm:$0xff]
          %v364 = vld [vmem:[%s291 + $0x50] sm:$0xff]
          %v365 = vld [vmem:[%s291 + $0x58] sm:$0xff]
          %v366 = vld [vmem:[%s291 + $0x60] sm:$0xff]
          %v367 = vld [vmem:[%s291 + $0x68] sm:$0xff]
          %v368 = vld [vmem:[%s291 + $0x70] sm:$0xff]
          %v369 = vld [vmem:[%s291 + $0x78] sm:$0xff]
          %v370 = vld [vmem:[%s291 + $0x80] sm:$0xff]
          %v371 = vld [vmem:[%s291 + $0x88] sm:$0xff]
          %v372 = vld [vmem:[%s291 + $0x90] sm:$0xff]
          %v373 = vld [vmem:[%s291 + $0x98] sm:$0xff]
          %v374 = vld [vmem:[%s291 + $0xa0] sm:$0xff]
          %v375 = vld [vmem:[%s291 + $0xa8] sm:$0xff]
          %v376 = vld [vmem:[%s291 + $0xb0] sm:$0xff]
          %v377 = vld [vmem:[%s291 + $0xb8] sm:$0xff]
          %v378 = vld [vmem:[%s291 + $0xc0] sm:$0xff]
          %v379 = vld [vmem:[%s291 + $0xc8] sm:$0xff]
          %v380 = vld [vmem:[%s291 + $0xd0] sm:$0xff]
          %v381 = vld [vmem:[%s291 + $0xd8] sm:$0xff]
          %v382 = vld [vmem:[%s291 + $0xe0] sm:$0xff]
          %v383 = vld [vmem:[%s291 + $0xe8] sm:$0xff]
          %v384 = vld [vmem:[%s291 + $0xf0] sm:$0xff]
          %v385 = vld [vmem:[%s291 + $0xf8] sm:$0xff]
          %386 = vmatprep.subr.mxu0 %v385
          %387 = vmatpush1.msra.mxu0 %v384
          %388 = vmatprep.subr.mxu0 %v383
          %389 = vmatpush1.msra.mxu0 %v382
          %390 = vmatprep.subr.mxu0 %v381
          %391 = vmatpush1.msra.mxu0 %v380
          %392 = vmatprep.subr.mxu0 %v379
          %393 = vmatpush1.msra.mxu0 %v378
          %394 = vmatprep.subr.mxu0 %v377
          %395 = vmatpush1.msra.mxu0 %v376
          %396 = vmatprep.subr.mxu0 %v375
          %397 = vmatpush1.msra.mxu0 %v374
          %398 = vmatprep.subr.mxu0 %v373
          %399 = vmatpush1.msra.mxu0 %v372
          %400 = vmatprep.subr.mxu0 %v371
          %401 = vmatpush1.msra.mxu0 %v370
          %402 = vmatprep.subr.mxu0 %v369
          %403 = vmatpush1.msra.mxu0 %v368
          %404 = vmatprep.subr.mxu0 %v367
          %405 = vmatpush1.msra.mxu0 %v366
          %406 = vmatprep.subr.mxu0 %v365
          %407 = vmatpush1.msra.mxu0 %v364
          %408 = vmatprep.subr.mxu0 %v363
          %409 = vmatpush1.msra.mxu0 %v362
          %410 = vmatprep.subr.mxu0 %v361
          %411 = vmatpush1.msra.mxu0 %v360
          %412 = vmatprep.subr.mxu0 %v359
          %413 = vmatpush1.msra.mxu0 %v358
          %414 = vmatprep.subr.mxu0 %v357
          %415 = vmatpush1.msra.mxu0 %v356
          %416 = vmatprep.subr.mxu0 %v355
          %417 = vmatpush1.msra.mxu0 %v354
          %418 = vmatprep.subr.mxu0 0.0
          %419 = vmatpush2.msra.mxu0 0.0
          %420 = vmatprep.subr.mxu0 0.0
          %421 = vmatpush2.msra.mxu0 0.0
          %422 = vmatprep.subr.mxu0 0.0
          %423 = vmatpush2.msra.mxu0 0.0
          %424 = vmatprep.subr.mxu0 0.0
          %425 = vmatpush2.msra.mxu0 0.0
          %426 = vmatprep.subr.mxu0 0.0
          %427 = vmatpush2.msra.mxu0 0.0
          %428 = vmatprep.subr.mxu0 0.0
          %429 = vmatpush2.msra.mxu0 0.0
          %430 = vmatprep.subr.mxu0 0.0
          %431 = vmatpush2.msra.mxu0 0.0
          %432 = vmatprep.subr.mxu0 0.0
          %433 = vmatpush2.msra.mxu0 0.0
          %434 = vmatprep.subr.mxu0 0.0
          %435 = vmatpush2.msra.mxu0 0.0
          %436 = vmatprep.subr.mxu0 0.0
          %437 = vmatpush2.msra.mxu0 0.0
          %438 = vmatprep.subr.mxu0 0.0
          %439 = vmatpush2.msra.mxu0 0.0
          %440 = vmatprep.subr.mxu0 0.0
          %441 = vmatpush2.msra.mxu0 0.0
          %442 = vmatprep.subr.mxu0 0.0
          %443 = vmatpush2.msra.mxu0 0.0
          %444 = vmatprep.subr.mxu0 0.0
          %445 = vmatpush2.msra.mxu0 0.0
          %446 = vmatprep.subr.mxu0 0.0
          %447 = vmatpush2.msra.mxu0 0.0
          %448 = vmatprep.subr.mxu0 0.0
          %449 = vmatpush2.msra.mxu0 0.0
          %450 = vmatprep.mubr.f32.mxu0 0.0
          %451 = vmatmul.mubr.f32.gmra.mxu0 %v352
          %v452 = vpop.f32.mrf.mxu0
          %v453 = vadd.f32 0.0, %v452
          %v454 = vpop.f32.mrf.mxu0
          %v455 = vadd.f32 0.0, %v454
          %456 = vmatprep.mubr.f32.mxu0 0.0
          %457 = vmatmul.mubr.f32.gmra.mxu0 %v353
          %v458 = vpop.f32.mrf.mxu0
          %v459 = vadd.f32 0.0, %v458
          %v460 = vpop.f32.mrf.mxu0
          %v461 = vadd.f32 0.0, %v460
          %462 = vdwg.mxu0
          %v463 = vxor.u32 %v453, 2147483648
          %v464 = vxor.u32 %v459, 2147483648
          %v465 = vmul.f32 %v463, 1.442695
          %v466 = vpow.pop %v465
          %v467 = vmul.f32 %v464, 1.442695
          %v468 = vpow.pop %v467
          %v469 = vadd.f32 %v466, 1.0
          %v470 = vadd.f32 %v468, 1.0
          %v471 = vrcp.pop %v469
          %v472 = vmul.f32 1.0, %v471
          %v473 = vrcp.pop %v470
          %v474 = vmul.f32 1.0, %v473
          %v475 = vmul.f32 %v453, %v472
          %v476 = vmul.f32 %v459, %v474
          %v477 = vmul.f32 %v475, %v455
          %v478 = vmul.f32 %v476, %v461
          %v479 = vld [vmem:[%s300] sm:$0xff]
          %v480 = vld [vmem:[%s300 + $0x8] sm:$0xff]
          %v481 = vld [vmem:[%s300 + $0x10] sm:$0xff]
          %v482 = vld [vmem:[%s300 + $0x18] sm:$0xff]
          %v483 = vld [vmem:[%s300 + $0x20] sm:$0xff]
          %v484 = vld [vmem:[%s300 + $0x28] sm:$0xff]
          %v485 = vld [vmem:[%s300 + $0x30] sm:$0xff]
          %v486 = vld [vmem:[%s300 + $0x38] sm:$0xff]
          %v487 = vld [vmem:[%s300 + $0x40] sm:$0xff]
          %v488 = vld [vmem:[%s300 + $0x48] sm:$0xff]
          %v489 = vld [vmem:[%s300 + $0x50] sm:$0xff]
          %v490 = vld [vmem:[%s300 + $0x58] sm:$0xff]
          %v491 = vld [vmem:[%s300 + $0x60] sm:$0xff]
          %v492 = vld [vmem:[%s300 + $0x68] sm:$0xff]
          %v493 = vld [vmem:[%s300 + $0x70] sm:$0xff]
          %v494 = vld [vmem:[%s300 + $0x78] sm:$0xff]
          %495 = vmatprep.subr.mxu0 0.0
          %496 = vmatpush1.msra.mxu0 %v494
          %497 = vmatprep.subr.mxu0 0.0
          %498 = vmatpush1.msra.mxu0 %v493
          %499 = vmatprep.subr.mxu0 0.0
          %500 = vmatpush1.msra.mxu0 %v492
          %501 = vmatprep.subr.mxu0 0.0
          %502 = vmatpush1.msra.mxu0 %v491
          %503 = vmatprep.subr.mxu0 0.0
          %504 = vmatpush1.msra.mxu0 %v490
          %505 = vmatprep.subr.mxu0 0.0
          %506 = vmatpush1.msra.mxu0 %v489
          %507 = vmatprep.subr.mxu0 0.0
          %508 = vmatpush1.msra.mxu0 %v488
          %509 = vmatprep.subr.mxu0 0.0
          %510 = vmatpush1.msra.mxu0 %v487
          %511 = vmatprep.subr.mxu0 0.0
          %512 = vmatpush1.msra.mxu0 %v486
          %513 = vmatprep.subr.mxu0 0.0
          %514 = vmatpush1.msra.mxu0 %v485
          %515 = vmatprep.subr.mxu0 0.0
          %516 = vmatpush1.msra.mxu0 %v484
          %517 = vmatprep.subr.mxu0 0.0
          %518 = vmatpush1.msra.mxu0 %v483
          %519 = vmatprep.subr.mxu0 0.0
          %520 = vmatpush1.msra.mxu0 %v482
          %521 = vmatprep.subr.mxu0 0.0
          %522 = vmatpush1.msra.mxu0 %v481
          %523 = vmatprep.subr.mxu0 0.0
          %524 = vmatpush1.msra.mxu0 %v480
          %525 = vmatprep.subr.mxu0 0.0
          %526 = vmatpush1.msra.mxu0 %v479
          %527 = vmatprep.subr.mxu0 0.0
          %528 = vmatpush2.msra.mxu0 0.0
          %529 = vmatprep.subr.mxu0 0.0
          %530 = vmatpush2.msra.mxu0 0.0
          %531 = vmatprep.subr.mxu0 0.0
          %532 = vmatpush2.msra.mxu0 0.0
          %533 = vmatprep.subr.mxu0 0.0
          %534 = vmatpush2.msra.mxu0 0.0
          %535 = vmatprep.subr.mxu0 0.0
          %536 = vmatpush2.msra.mxu0 0.0
          %537 = vmatprep.subr.mxu0 0.0
          %538 = vmatpush2.msra.mxu0 0.0
          %539 = vmatprep.subr.mxu0 0.0
          %540 = vmatpush2.msra.mxu0 0.0
          %541 = vmatprep.subr.mxu0 0.0
          %542 = vmatpush2.msra.mxu0 0.0
          %543 = vmatprep.subr.mxu0 0.0
          %544 = vmatpush2.msra.mxu0 0.0
          %545 = vmatprep.subr.mxu0 0.0
          %546 = vmatpush2.msra.mxu0 0.0
          %547 = vmatprep.subr.mxu0 0.0
          %548 = vmatpush2.msra.mxu0 0.0
          %549 = vmatprep.subr.mxu0 0.0
          %550 = vmatpush2.msra.mxu0 0.0
          %551 = vmatprep.subr.mxu0 0.0
          %552 = vmatpush2.msra.mxu0 0.0
          %553 = vmatprep.subr.mxu0 0.0
          %554 = vmatpush2.msra.mxu0 0.0
          %555 = vmatprep.subr.mxu0 0.0
          %556 = vmatpush2.msra.mxu0 0.0
          %557 = vmatprep.subr.mxu0 0.0
          %558 = vmatpush2.msra.mxu0 0.0
          %559 = vmatprep.mubr.f32.mxu0 0.0
          %560 = vmatmul.mubr.f32.gmra.mxu0 %v477
          %v561 = vpop.f32.mrf.mxu0
          %v562 = vadd.f32 0.0, %v561
          %v563 = vpop.f32.mrf.mxu0
          %564 = vmatprep.mubr.f32.mxu0 0.0
          %565 = vmatmul.mubr.f32.gmra.mxu0 %v478
          %v566 = vpop.f32.mrf.mxu0
          %v567 = vadd.f32 0.0, %v566
          %v568 = vpop.f32.mrf.mxu0
          %569 = vdwg.mxu0
          %p570 = scmp.eq.s32.totalorder %s42, 0
          // Predicated region
          $region49: #{tpu_custom_call.1} parent=47 // pred_check
            %p571 = pneg %p570
          $region50: #{tpu_custom_call.1} parent=47 // pred_check_branch
            %573 = sbr.rel (%p571) target = $region52
          $region51: #{tpu_custom_call.1} parent=47 // pred_region
            %574 = vst [vmem:[#allocation2] sm:$0xff] %v562
            %575 = vst [vmem:[#allocation2 + $0x8] sm:$0xff] %v567
          $region52: #{tpu_custom_call.1} parent=47 // pred_fallthru
            _
          %p576 = scmp.gt.s32.totalorder %s42, 0
          // Predicated region
          $region53: #{tpu_custom_call.1} parent=47 // pred_check
            %p577 = pneg %p576
          $region54: #{tpu_custom_call.1} parent=47 // pred_check_branch
            %579 = sbr.rel (%p577) target = $region56
          $region55: #{tpu_custom_call.1} parent=47 // pred_region
            %v580 = vld [vmem:[#allocation2] sm:$0xff]
            %v581 = vld [vmem:[#allocation2 + $0x8] sm:$0xff]
            %v582 = vadd.f32 %v580, %v562
            %v583 = vadd.f32 %v581, %v567
            %584 = vst [vmem:[#allocation2] sm:$0xff] %v582
            %585 = vst [vmem:[#allocation2 + $0x8] sm:$0xff] %v583
          $region56: #{tpu_custom_call.1} parent=47 // pred_fallthru
            _
          // Predicated region
          $region57: #{tpu_custom_call.1} parent=47 // pred_check
            %p586 = pneg %p570
          $region58: #{tpu_custom_call.1} parent=47 // pred_check_branch
            %588 = sbr.rel (%p586) target = $region60
          $region59: #{tpu_custom_call.1} parent=47 // pred_region
            %v589 = vld [vmem:[#allocation2] sm:$0xff]
            %v590 = vld [vmem:[#allocation2 + $0x8] sm:$0xff]
            %591 = vst [vmem:[%s332] sm:$0xff] %v589
            %592 = vst [vmem:[%s332 + $0x8] sm:$0xff] %v590
          $region60: #{tpu_custom_call.1} parent=47 // pred_fallthru
            _
        $region48: #{tpu_custom_call.1} parent=31 // pred_fallthru
          _
        %s593 = sand.u32 %s161, 1
        %s594 = scalar_lea.sflag [#allocation9], %s593
        %s595 = sand.u32 %s161, 1
        %s596 = smul.addr %s595, 16
        %s597 = scalar_lea.vmem [#allocation13], %s596
        // Predicated region
        $region61: #{tpu_custom_call.1} parent=31 // pred_check
          %p598 = pneg %p171
        $region62: #{tpu_custom_call.1} parent=31 // pred_check_branch
          %600 = sbr.rel (%p598) target = $region64
        $region63: #{tpu_custom_call.1} parent=31 // pred_region
          %s601 = smul.u32 2, %s41
          %s603 = ssub.s32 256, 256
          %604 = vsyncadd %s594, %s603
          %s605 = smul.addr %s601, 128
          %s606 = scalar_lea.hbm %s6, %s605
          %s607 = sshll.u32 %s597, 4
          %s608 = int_to_ptr.vmem [resolvable:$true] %s607
          %613 = dma.vmem_to_hbm [thread:$0]  %s608, 256, %s606, %s594, 128, 128, 8
        $region64: #{tpu_custom_call.1} parent=31 // pred_fallthru
          _
      $region32: #{tpu_custom_call.1} parent=5 // pred_fallthru
        _
      %p614 = scmp.le.s32.totalorder 2, %s32
      // Predicated region
      $region65: #{tpu_custom_call.1} parent=5 // pred_check
        %p615 = pneg %p614
      $region66: #{tpu_custom_call.1} parent=5 // pred_check_branch
        %617 = sbr.rel (%p615) target = $region68
      $region67: #{tpu_custom_call.1} parent=5 // pred_region
        %s618 = ssub.s32 %s32, 2
        // Predicated region
        $region69: #{tpu_custom_call.1} parent=67 // pred_check
          %p619 = pneg %p177
        $region70: #{tpu_custom_call.1} parent=67 // pred_check_branch
          %621 = sbr.rel (%p619) target = $region72
        $region71: #{tpu_custom_call.1} parent=67 // pred_region
          %s622 = sand.u32 %s162, 1
          %s623 = scalar_lea.sflag [#allocation9], %s622
          %s624 = sand.u32 %s162, 1
          %s625 = smul.addr %s624, 16
          %s626 = scalar_lea.vmem [#allocation13], %s625
          %627 = dma.done %s623, 256
        $region72: #{tpu_custom_call.1} parent=67 // pred_fallthru
          _
      $region68: #{tpu_custom_call.1} parent=5 // pred_fallthru
        _
    $region6: #{tpu_custom_call.1} parent=1 // loop_footer
      %s36 = sadd.s32 1, %s32
    $region7: #{tpu_custom_call.1} parent=1 // loop_footer_branch
      %31 = sbr.rel target = $region3
    $region8: #{tpu_custom_call.1} parent=1 // loop_exit
      _
    %628 = vsyncpa [#allocation8], 1
    %s629 = scalar_lea.sflag [#allocation8], 1
    %630 = vsyncpa %s629, 1
    %631 = vsyncpa [#allocation11], 1
    %s632 = scalar_lea.sflag [#allocation11], 1
    %633 = vsyncpa %s632, 1
    %634 = vsyncpa [#allocation9], 1
    %s635 = scalar_lea.sflag [#allocation9], 1
    %636 = vsyncpa %s635, 1

</llo_original>
